<compile_context>
chip_gen: v7x
topology: tpu7x:2x2x1
jax: 0.10.0
libtpu: 0.0.40
codegen_flags: <defaults>
</compile_context>

<pallas_src>
import jax
import jax.numpy as jnp
from jax.experimental import pallas as pl
from jax.experimental.pallas import tpu as pltpu

ALPHA_EVM = 0.03
HIDDEN = 32
DEFAULT_TILE_N = 16384  # max rows per grid step (lane axis); sweep 8192-16384 if desired


def evm_constraint_kernel(xy1_ref, w1b_ref, w2_ref, b2_ref, wj_ref, cj_ref, out_ref):
    # Layer 1 on the MXU, bias folded via the ones row:  z = [W1^T | b1] @ [x; y; 1]
    z = jnp.dot(w1b_ref[...], xy1_ref[...],
                preferred_element_type=jnp.float32)           # (H, T)
    h = jnp.tanh(z)                                           # (H, T)  single EUP op
    hh = h * h                                                # (H, T)  one VALU pass

    # Forward head: rows [u, v, evm]
    out3 = jnp.dot(w2_ref[...], h,
                   preferred_element_type=jnp.float32) + b2_ref[...]      # (3, T)
    # All four derivatives in one matmul: jac = Wj @ (1 - hh) = cJ - Wj @ hh
    # rows [u_x, v_x, u_y, v_y]
    jac4 = cj_ref[...] - jnp.dot(wj_ref[...], hh,
                                 preferred_element_type=jnp.float32)      # (4, T)

    u = out3[0:1, :]
    v = out3[1:2, :]
    evm = out3[2:3, :]
    u_x = jac4[0:1, :]
    v_x = jac4[1:2, :]
    u_y = jac4[2:3, :]
    v_y = jac4[3:4, :]

    residual = (u - 0.5) * (u * u_x + v * u_y) + (v - 0.5) * (u * v_x + v * v_y)
    out_ref[...] = residual - ALPHA_EVM * evm                 # (1, T) lane-dense store


def evm_constraint(xy, w1, b1, w2, b2, *, tile_n=DEFAULT_TILE_N):
    """xy: (N, 2) f32 coordinates.  Returns evm_constraint: (N, 1) f32."""
    assert tile_n % 128 == 0
    n = xy.shape[0]
    h_dim = w1.shape[1]

    # --- tile / grid selection -------------------------------------------------
    # Pad N to a lane multiple, then pick the number of grid steps so that
    #   * tiles never exceed tile_n, and
    #   * there are >=2 "parallel" steps whenever possible (v7x has 2 TensorCores).
    n_pad = pl.cdiv(n, 128) * 128
    num_tiles = max(pl.cdiv(n_pad, tile_n), min(2, n_pad // 128))
    tile = pl.cdiv(n_pad, num_tiles * 128) * 128              # <= tile_n, multiple of 128
    n_pad = tile * num_tiles
    grid = (num_tiles,)

    # --- input staging (single fused transpose+concat+pad, no scatter) ---------
    xy_t = xy.T.astype(jnp.float32)                           # (2, N)
    xy1 = jnp.concatenate([xy_t, jnp.ones((1, n), jnp.float32)], axis=0)   # (3, N)
    xy1 = jnp.pad(xy1, ((0, 0), (0, n_pad - n)))              # (3, n_pad)

    # --- resident (non-tiled) weights, pre-transposed / pre-fused --------------
    w1b = jnp.concatenate([w1.T, b1.reshape(h_dim, 1)], axis=1).astype(jnp.float32)  # (H, 3)
    w2_t = w2.T.astype(jnp.float32)                           # (3, H), rows [u, v, evm]
    b2_t = b2.reshape(3, 1).astype(jnp.float32)               # (3, 1)
    w2x = w1[0][:, None] * w2                                 # (H, 3): d(out)/dx weights
    w2y = w1[1][:, None] * w2                                 # (H, 3): d(out)/dy weights
    wj = jnp.concatenate([w2x[:, :2], w2y[:, :2]], axis=1).T.astype(jnp.float32)  # (4, H)
    cj = jnp.sum(wj, axis=1, keepdims=True)                   # (4, 1) = Wj @ 1_H

    cost = pl.CostEstimate(
        flops=2 * n_pad * h_dim * (3 + 3 + 4) + 3 * n_pad * h_dim + 16 * n_pad,
        transcendentals=n_pad * h_dim,
        bytes_accessed=4 * (3 * n_pad + n_pad) + 4 * (h_dim * (3 + 3 + 4) + 3 + 4),
    )

    out_t = pl.pallas_call(
        evm_constraint_kernel,
        out_shape=jax.ShapeDtypeStruct((1, n_pad), jnp.float32),
        grid_spec=pltpu.PrefetchScalarGridSpec(
            num_scalar_prefetch=0,
            grid=grid,
            in_specs=[
                pl.BlockSpec((3, tile), lambda i: (0, i)),        # [x; y; 1] tile
                pl.BlockSpec((h_dim, 3), lambda i: (0, 0)),       # [W1^T | b1] (resident)
                pl.BlockSpec((3, h_dim), lambda i: (0, 0)),       # W2^T
                pl.BlockSpec((3, 1), lambda i: (0, 0)),           # b2^T
                pl.BlockSpec((4, h_dim), lambda i: (0, 0)),       # fused Jacobian weights
                pl.BlockSpec((4, 1), lambda i: (0, 0)),           # cJ = Wj @ 1
            ],
            out_specs=pl.BlockSpec((1, tile), lambda i: (0, i)),  # lane-dense output
        ),
        compiler_params=pltpu.CompilerParams(
            dimension_semantics=("parallel",),
            vmem_limit_bytes=32 * 1024 * 1024,
        ),
        cost_estimate=cost,
    )(xy1, w1b, w2_t, b2_t, wj, cj)

    return out_t[0, :n][:, None]                                # (N, 1)


def _reference(xy, w1, b1, w2, b2):
    """Pure-JAX reference mirroring the PyTorch autograd semantics."""
    def net(p):                       # p: (2,) -> (3,) = (u, v, evm)
        hh = jnp.tanh(p @ w1 + b1[0])
        return hh @ w2 + b2[0]

    outs = jax.vmap(net)(xy)                              # (N, 3)
    jac = jax.vmap(jax.jacrev(net))(xy)                   # (N, 3, 2)
    u, v, evm = outs[:, 0:1], outs[:, 1:2], outs[:, 2:3]
    u_x, u_y = jac[:, 0, 0:1], jac[:, 0, 1:2]
    v_x, v_y = jac[:, 1, 0:1], jac[:, 1, 1:2]
    residual = (u - 0.5) * (u * u_x + v * u_y) + (v - 0.5) * (u * v_x + v * v_y)
    return residual - ALPHA_EVM * evm


if __name__ == "__main__":
    key = jax.random.PRNGKey(0)
    k_xy, k_w1, k_b1, k_w2, k_b2 = jax.random.split(key, 5)

    # Deterministic synthetic "flow network" parameters.
    w1 = 0.5 * jax.random.normal(k_w1, (2, HIDDEN), dtype=jnp.float32)
    b1 = 0.1 * jax.random.normal(k_b1, (1, HIDDEN), dtype=jnp.float32)
    w2 = 0.5 * jax.random.normal(k_w2, (HIDDEN, 3), dtype=jnp.float32)
    b2 = 0.1 * jax.random.normal(k_b2, (1, 3), dtype=jnp.float32)

    def check(n, tile_n):
        xy = jax.random.uniform(jax.random.fold_in(k_xy, n), (n, 2), dtype=jnp.float32)
        out = jax.block_until_ready(evm_constraint(xy, w1, b1, w2, b2, tile_n=tile_n))
        ref = jax.block_until_ready(_reference(xy, w1, b1, w2, b2))
        assert out.shape == (n, 1)
        err = float(jnp.max(jnp.abs(out - ref)))
        assert err < 1e-4, f"N={n}: max abs err {err}"

    check(256, DEFAULT_TILE_N)   # small: split into 2 tiles (>=2 parallel steps)
    check(300, DEFAULT_TILE_N)   # N not a multiple of 128 -> padding path
    check(1024, 256)             # explicit multi-tile grid path (grid=(4,))
    check(20000, DEFAULT_TILE_N) # large-tile path (tile ~10K lanes, grid=(2,))

    print("KERNEL_OK")
</pallas_src>

<mosaic_0001>
module attributes {stable_mosaic.version = 11 : i64} {
  func.func @evm_constraint_kernel(%arg0: i32, %arg1: memref<3x128xf32, #tpu.memory_space<vmem>>, %arg2: memref<32x3xf32, #tpu.memory_space<vmem>>, %arg3: memref<3x32xf32, #tpu.memory_space<vmem>>, %arg4: memref<3x1xf32, #tpu.memory_space<vmem>>, %arg5: memref<4x32xf32, #tpu.memory_space<vmem>>, %arg6: memref<4x1xf32, #tpu.memory_space<vmem>>, %arg7: memref<1x128xf32, #tpu.memory_space<vmem>>) attributes {dimension_semantics = [#tpu.dimension_semantics<parallel>], iteration_bounds = array<i64: 2>, scalar_prefetch = 0 : i64, scratch_operands = 0 : i64, tpu.core_type = #tpu.core_type<tc>, window_params = [{transform_indices = @transform_0, window_bounds = array<i64: 3, 128>}, {pipeline_mode = #tpu.pipeline_mode<synchronous>, transform_indices = @transform_1, window_bounds = array<i64: 32, 3>}, {pipeline_mode = #tpu.pipeline_mode<synchronous>, transform_indices = @transform_2, window_bounds = array<i64: 3, 32>}, {pipeline_mode = #tpu.pipeline_mode<synchronous>, transform_indices = @transform_3, window_bounds = array<i64: 3, 1>}, {pipeline_mode = #tpu.pipeline_mode<synchronous>, transform_indices = @transform_4, window_bounds = array<i64: 4, 32>}, {pipeline_mode = #tpu.pipeline_mode<synchronous>, transform_indices = @transform_5, window_bounds = array<i64: 4, 1>}, {transform_indices = @transform_6, window_bounds = array<i64: 1, 128>}]} {
    %c0 = arith.constant 0 : index
    %c0_0 = arith.constant 0 : index
    %0 = vector.load %arg2[%c0, %c0_0] : memref<32x3xf32, #tpu.memory_space<vmem>>, vector<32x3xf32>
    %c0_1 = arith.constant 0 : index
    %c0_2 = arith.constant 0 : index
    %1 = vector.load %arg1[%c0_1, %c0_2] : memref<3x128xf32, #tpu.memory_space<vmem>>, vector<3x128xf32>
    %cst = arith.constant dense<0.000000e+00> : vector<32x128xf32>
    %2 = tpu.matmul %0, %1, %cst {dimension_numbers = #tpu.dot_dimension_numbers<[1], [0], [0], [1], [0, 0, 1, 1], [], []>} : vector<32x3xf32>, vector<3x128xf32>, vector<32x128xf32> -> vector<32x128xf32>
    %3 = math.tanh %2 : vector<32x128xf32>
    %4 = arith.mulf %3, %3 : vector<32x128xf32>
    %c0_3 = arith.constant 0 : index
    %c0_4 = arith.constant 0 : index
    %5 = vector.load %arg3[%c0_3, %c0_4] : memref<3x32xf32, #tpu.memory_space<vmem>>, vector<3x32xf32>
    %cst_5 = arith.constant dense<0.000000e+00> : vector<3x128xf32>
    %6 = tpu.matmul %5, %3, %cst_5 {dimension_numbers = #tpu.dot_dimension_numbers<[1], [0], [0], [1], [0, 0, 1, 1], [], []>} : vector<3x32xf32>, vector<32x128xf32>, vector<3x128xf32> -> vector<3x128xf32>
    %c0_6 = arith.constant 0 : index
    %c0_7 = arith.constant 0 : index
    %7 = vector.load %arg4[%c0_6, %c0_7] : memref<3x1xf32, #tpu.memory_space<vmem>>, vector<3x1xf32>
    %8 = vector.broadcast %7 : vector<3x1xf32> to vector<3x128xf32>
    %9 = arith.addf %6, %8 : vector<3x128xf32>
    %c0_8 = arith.constant 0 : index
    %c0_9 = arith.constant 0 : index
    %10 = vector.load %arg6[%c0_8, %c0_9] : memref<4x1xf32, #tpu.memory_space<vmem>>, vector<4x1xf32>
    %c0_10 = arith.constant 0 : index
    %c0_11 = arith.constant 0 : index
    %11 = vector.load %arg5[%c0_10, %c0_11] : memref<4x32xf32, #tpu.memory_space<vmem>>, vector<4x32xf32>
    %cst_12 = arith.constant dense<0.000000e+00> : vector<4x128xf32>
    %12 = tpu.matmul %11, %4, %cst_12 {dimension_numbers = #tpu.dot_dimension_numbers<[1], [0], [0], [1], [0, 0, 1, 1], [], []>} : vector<4x32xf32>, vector<32x128xf32>, vector<4x128xf32> -> vector<4x128xf32>
    %13 = vector.broadcast %10 : vector<4x1xf32> to vector<4x128xf32>
    %14 = arith.subf %13, %12 : vector<4x128xf32>
    %15 = vector.extract_strided_slice %9 {offsets = [0, 0], sizes = [1, 128], strides = [1, 1]} : vector<3x128xf32> to vector<1x128xf32>
    %16 = vector.extract_strided_slice %9 {offsets = [1, 0], sizes = [1, 128], strides = [1, 1]} : vector<3x128xf32> to vector<1x128xf32>
    %17 = vector.extract_strided_slice %9 {offsets = [2, 0], sizes = [1, 128], strides = [1, 1]} : vector<3x128xf32> to vector<1x128xf32>
    %18 = vector.extract_strided_slice %14 {offsets = [0, 0], sizes = [1, 128], strides = [1, 1]} : vector<4x128xf32> to vector<1x128xf32>
    %19 = vector.extract_strided_slice %14 {offsets = [1, 0], sizes = [1, 128], strides = [1, 1]} : vector<4x128xf32> to vector<1x128xf32>
    %20 = vector.extract_strided_slice %14 {offsets = [2, 0], sizes = [1, 128], strides = [1, 1]} : vector<4x128xf32> to vector<1x128xf32>
    %21 = vector.extract_strided_slice %14 {offsets = [3, 0], sizes = [1, 128], strides = [1, 1]} : vector<4x128xf32> to vector<1x128xf32>
    %cst_13 = arith.constant 5.000000e-01 : f32
    %22 = vector.broadcast %cst_13 : f32 to vector<1x128xf32>
    %23 = arith.subf %15, %22 : vector<1x128xf32>
    %24 = arith.mulf %15, %18 : vector<1x128xf32>
    %25 = arith.mulf %16, %20 : vector<1x128xf32>
    %26 = arith.addf %24, %25 : vector<1x128xf32>
    %27 = arith.mulf %23, %26 : vector<1x128xf32>
    %cst_14 = arith.constant 5.000000e-01 : f32
    %28 = vector.broadcast %cst_14 : f32 to vector<1x128xf32>
    %29 = arith.subf %16, %28 : vector<1x128xf32>
    %30 = arith.mulf %15, %19 : vector<1x128xf32>
    %31 = arith.mulf %16, %21 : vector<1x128xf32>
    %32 = arith.addf %30, %31 : vector<1x128xf32>
    %33 = arith.mulf %29, %32 : vector<1x128xf32>
    %34 = arith.addf %27, %33 : vector<1x128xf32>
    %cst_15 = arith.constant 3.000000e-02 : f32
    %35 = vector.broadcast %cst_15 : f32 to vector<1x128xf32>
    %36 = arith.mulf %35, %17 : vector<1x128xf32>
    %37 = arith.subf %34, %36 : vector<1x128xf32>
    %c0_16 = arith.constant 0 : index
    %c0_17 = arith.constant 0 : index
    %38 = vector.load %arg7[%c0_16, %c0_17] : memref<1x128xf32, #tpu.memory_space<vmem>>, vector<1x128xf32>
    tpu.vector_store %arg7[%c0_16, %c0_17], %37 {strides = array<i32>} : memref<1x128xf32, #tpu.memory_space<vmem>>, vector<1x128xf32>,
    return
  }
  func.func @transform_0(%arg0: i32) -> (i32, i32) {
    %c0_i32 = arith.constant 0 : i32
    %c0_i32_0 = arith.constant 0 : i32
    return %c0_i32, %arg0 : i32, i32
  }
  func.func @transform_1(%arg0: i32) -> (i32, i32) {
    %c0_i32 = arith.constant 0 : i32
    %c0_i32_0 = arith.constant 0 : i32
    %c0_i32_1 = arith.constant 0 : i32
    return %c0_i32, %c0_i32_0 : i32, i32
  }
  func.func @transform_2(%arg0: i32) -> (i32, i32) {
    %c0_i32 = arith.constant 0 : i32
    %c0_i32_0 = arith.constant 0 : i32
    %c0_i32_1 = arith.constant 0 : i32
    return %c0_i32, %c0_i32_0 : i32, i32
  }
  func.func @transform_3(%arg0: i32) -> (i32, i32) {
    %c0_i32 = arith.constant 0 : i32
    %c0_i32_0 = arith.constant 0 : i32
    %c0_i32_1 = arith.constant 0 : i32
    return %c0_i32, %c0_i32_0 : i32, i32
  }
  func.func @transform_4(%arg0: i32) -> (i32, i32) {
    %c0_i32 = arith.constant 0 : i32
    %c0_i32_0 = arith.constant 0 : i32
    %c0_i32_1 = arith.constant 0 : i32
    return %c0_i32, %c0_i32_0 : i32, i32
  }
  func.func @transform_5(%arg0: i32) -> (i32, i32) {
    %c0_i32 = arith.constant 0 : i32
    %c0_i32_0 = arith.constant 0 : i32
    %c0_i32_1 = arith.constant 0 : i32
    return %c0_i32, %c0_i32_0 : i32, i32
  }
  func.func @transform_6(%arg0: i32) -> (i32, i32) {
    %c0_i32 = arith.constant 0 : i32
    %c0_i32_0 = arith.constant 0 : i32
    return %c0_i32, %arg0 : i32, i32
  }
}

</mosaic_0001>

<llo_original>
// kernel: tpu_custom_call.1
$region0: #{tpu_custom_call.1}
  #allocation0 [shape = 'u32[]', space=smem, size = 0x4, offset = 0x4, fixed_abs, tag = 'smem constant byte address 0x4 - core index']
  #allocation1 [shape = 'u32[144,128]{1,0:T(1,128)}', space=vmem, size = 0x12000, scoped, tag = 'internal scratch']
  %s0 = inlined_call_operand.vmem [shape: f32[3,256], index: 0, kind: input, shape index: {}]
  %s1 = inlined_call_operand.vmem [shape: f32[32,3], index: 1, kind: input, shape index: {}]
  %s2 = inlined_call_operand.vmem [shape: f32[3,32], index: 2, kind: input, shape index: {}]
  %s3 = inlined_call_operand.vmem [shape: f32[3,1], index: 3, kind: input, shape index: {}]
  %s4 = inlined_call_operand.vmem [shape: f32[4,32], index: 4, kind: input, shape index: {}]
  %s5 = inlined_call_operand.vmem [shape: f32[4,1], index: 5, kind: input, shape index: {}]
  %s6 = inlined_call_operand.hbm [shape: f32[1,256], index: 6, kind: output, shape index: {}]
  %s7 = sld [smem:[#allocation0]]
  $region57: #{tpu_custom_call.1} parent=0
    _
  %s9 = ssub.s32 1, %s7
  %s10 = scalar_select 0, %s9, %s7
  $region1: #{tpu_custom_call.1} parent=0
    #allocation2 [shape = 'u8[1024]{0}', space=vmem, size = 0x400, scoped, tag = 'output window, operand 0']
    #allocation3 [shape = 's32[2]{0}', space=sflag, size = 0x8, scoped, tag = 'scoped memory for tpu_custom_call.1']
    %11 = vsyncpa [#allocation3], 0
    %s12 = scalar_lea.sflag [#allocation3], 1
    %13 = vsyncpa %s12, 0
    loop: start=0, step=1, limit=4
    $region2: #{tpu_custom_call.1} parent=1 // loop_pre_header
      _
    $region3: #{tpu_custom_call.1} parent=1 // loop_header
      %s15 = sphi 0, %s19
      %p16 = scmp.ge.s32.totalorder %s15, 4
      %s25 = sphi 0, %s27
      %s28 = sphi 0, %s25
      %s29 = sphi 0, %s28
      %s45 = sphi 0, %s29
      %s49 = sphi 0, %s49
      %s51 = sphi 0, %s49
      %s52 = sphi 0, %s51
      %s66 = sphi 0, %s52
      %s70 = sphi 0, %s70
      %s72 = sphi 0, %s70
      %s73 = sphi 0, %s72
      %s87 = sphi 0, %s73
      %s91 = sphi 0, %s91
      %s93 = sphi 0, %s91
      %s94 = sphi 0, %s93
      %s108 = sphi 0, %s94
      %s112 = sphi 0, %s112
      %s114 = sphi 0, %s112
      %s115 = sphi 0, %s114
      %s129 = sphi 0, %s115
      %s133 = sphi 0, %s133
      %s135 = sphi 0, %s133
      %s136 = sphi 0, %s135
      %s150 = sphi 0, %s136
      %s156 = sphi 0, %s158
      %s159 = sphi 0, %s156
      %s160 = sphi 0, %s159
      %s176 = sphi 0, %s160
    $region4: #{tpu_custom_call.1} parent=1 // loop_header_branch
      %18 = sbr.rel (%p16) target = $region8
    $region5: #{tpu_custom_call.1} parent=1 // loop_body
      %s20 = ssub.s32 %s15, 1
      %s21 = ssub.s32 %s15, 2
      %s22 = sadd.s32 %s15, 1
      %s23 = ssub.s32 %s15, %s22
      %p24 = scmp.eq.s32.totalorder %s23, 0
      %s26 = sadd.s32 %s25, 1
      %s27 = scalar_select %p24, %s25, %s26
      %p30 = pneg %p24
      %p31 = scmp.eq.s32.totalorder %s15, 1
      %p32 = por %p30, %p31
      %p33 = scmp.ne.s32.totalorder %s25, %s28
      %p34 = scmp.eq.s32.totalorder %s15, 0
      %p35 = por %p33, %p34
      %p36 = scmp.ne.s32.totalorder %s25, %s28
      %p37 = scmp.eq.s32.totalorder %s20, 1
      %p38 = por %p36, %p37
      %p39 = scmp.ne.s32.totalorder %s28, %s29
      %p40 = scmp.eq.s32.totalorder %s20, 0
      %p41 = por %p39, %p40
      %p42 = scmp.ne.s32.totalorder %s28, %s29
      %p43 = scmp.eq.s32.totalorder %s21, 1
      %p44 = por %p42, %p43
      %p46 = scmp.ne.s32.totalorder %s29, %s45
      %p47 = scmp.eq.s32.totalorder %s21, 0
      %p48 = por %p46, %p47
      %s50 = sadd.s32 %s49, 1
      %p53 = scmp.eq.s32.totalorder %s15, 1
      %p54 = scmp.ne.s32.totalorder %s49, %s51
      %p55 = scmp.eq.s32.totalorder %s15, 0
      %p56 = por %p54, %p55
      %p57 = scmp.ne.s32.totalorder %s49, %s51
      %p58 = scmp.eq.s32.totalorder %s20, 1
      %p59 = por %p57, %p58
      %p60 = scmp.ne.s32.totalorder %s51, %s52
      %p61 = scmp.eq.s32.totalorder %s20, 0
      %p62 = por %p60, %p61
      %p63 = scmp.ne.s32.totalorder %s51, %s52
      %p64 = scmp.eq.s32.totalorder %s21, 1
      %p65 = por %p63, %p64
      %p67 = scmp.ne.s32.totalorder %s52, %s66
      %p68 = scmp.eq.s32.totalorder %s21, 0
      %p69 = por %p67, %p68
      %s71 = sadd.s32 %s70, 1
      %p74 = scmp.eq.s32.totalorder %s15, 1
      %p75 = scmp.ne.s32.totalorder %s70, %s72
      %p76 = scmp.eq.s32.totalorder %s15, 0
      %p77 = por %p75, %p76
      %p78 = scmp.ne.s32.totalorder %s70, %s72
      %p79 = scmp.eq.s32.totalorder %s20, 1
      %p80 = por %p78, %p79
      %p81 = scmp.ne.s32.totalorder %s72, %s73
      %p82 = scmp.eq.s32.totalorder %s20, 0
      %p83 = por %p81, %p82
      %p84 = scmp.ne.s32.totalorder %s72, %s73
      %p85 = scmp.eq.s32.totalorder %s21, 1
      %p86 = por %p84, %p85
      %p88 = scmp.ne.s32.totalorder %s73, %s87
      %p89 = scmp.eq.s32.totalorder %s21, 0
      %p90 = por %p88, %p89
      %s92 = sadd.s32 %s91, 1
      %p95 = scmp.eq.s32.totalorder %s15, 1
      %p96 = scmp.ne.s32.totalorder %s91, %s93
      %p97 = scmp.eq.s32.totalorder %s15, 0
      %p98 = por %p96, %p97
      %p99 = scmp.ne.s32.totalorder %s91, %s93
      %p100 = scmp.eq.s32.totalorder %s20, 1
      %p101 = por %p99, %p100
      %p102 = scmp.ne.s32.totalorder %s93, %s94
      %p103 = scmp.eq.s32.totalorder %s20, 0
      %p104 = por %p102, %p103
      %p105 = scmp.ne.s32.totalorder %s93, %s94
      %p106 = scmp.eq.s32.totalorder %s21, 1
      %p107 = por %p105, %p106
      %p109 = scmp.ne.s32.totalorder %s94, %s108
      %p110 = scmp.eq.s32.totalorder %s21, 0
      %p111 = por %p109, %p110
      %s113 = sadd.s32 %s112, 1
      %p116 = scmp.eq.s32.totalorder %s15, 1
      %p117 = scmp.ne.s32.totalorder %s112, %s114
      %p118 = scmp.eq.s32.totalorder %s15, 0
      %p119 = por %p117, %p118
      %p120 = scmp.ne.s32.totalorder %s112, %s114
      %p121 = scmp.eq.s32.totalorder %s20, 1
      %p122 = por %p120, %p121
      %p123 = scmp.ne.s32.totalorder %s114, %s115
      %p124 = scmp.eq.s32.totalorder %s20, 0
      %p125 = por %p123, %p124
      %p126 = scmp.ne.s32.totalorder %s114, %s115
      %p127 = scmp.eq.s32.totalorder %s21, 1
      %p128 = por %p126, %p127
      %p130 = scmp.ne.s32.totalorder %s115, %s129
      %p131 = scmp.eq.s32.totalorder %s21, 0
      %p132 = por %p130, %p131
      %s134 = sadd.s32 %s133, 1
      %p137 = scmp.eq.s32.totalorder %s15, 1
      %p138 = scmp.ne.s32.totalorder %s133, %s135
      %p139 = scmp.eq.s32.totalorder %s15, 0
      %p140 = por %p138, %p139
      %p141 = scmp.ne.s32.totalorder %s133, %s135
      %p142 = scmp.eq.s32.totalorder %s20, 1
      %p143 = por %p141, %p142
      %p144 = scmp.ne.s32.totalorder %s135, %s136
      %p145 = scmp.eq.s32.totalorder %s20, 0
      %p146 = por %p144, %p145
      %p147 = scmp.ne.s32.totalorder %s135, %s136
      %p148 = scmp.eq.s32.totalorder %s21, 1
      %p149 = por %p147, %p148
      %p151 = scmp.ne.s32.totalorder %s136, %s150
      %p152 = scmp.eq.s32.totalorder %s21, 0
      %p153 = por %p151, %p152
      %s154 = ssub.s32 %s15, %s22
      %p155 = scmp.eq.s32.totalorder %s154, 0
      %s157 = sadd.s32 %s156, 1
      %s158 = scalar_select %p155, %s156, %s157
      %p161 = pneg %p155
      %p162 = scmp.eq.s32.totalorder %s15, 1
      %p163 = por %p161, %p162
      %p164 = scmp.ne.s32.totalorder %s156, %s159
      %p165 = scmp.eq.s32.totalorder %s15, 0
      %p166 = por %p164, %p165
      %p167 = scmp.ne.s32.totalorder %s156, %s159
      %p168 = scmp.eq.s32.totalorder %s20, 1
      %p169 = por %p167, %p168
      %p170 = scmp.ne.s32.totalorder %s159, %s160
      %p171 = scmp.eq.s32.totalorder %s20, 0
      %p172 = por %p170, %p171
      %p173 = scmp.ne.s32.totalorder %s159, %s160
      %p174 = scmp.eq.s32.totalorder %s21, 1
      %p175 = por %p173, %p174
      %p177 = scmp.ne.s32.totalorder %s160, %s176
      %p178 = scmp.eq.s32.totalorder %s21, 0
      %p179 = por %p177, %p178
      %p180 = scmp.le.s32.totalorder 1, %s15
      %p181 = scmp.lt.s32.totalorder %s15, 3
      %p182 = pnand %p180, %p181
      %p183 = pneg %p182
      // Predicated region
      $region9: #{tpu_custom_call.1} parent=5 // pred_check
        _
      $region10: #{tpu_custom_call.1} parent=5 // pred_check_branch
        %185 = sbr.rel (%p182) target = $region12
      $region11: #{tpu_custom_call.1} parent=5 // pred_region
        %s186 = ssub.s32 %s15, 1
        // Predicated region
        $region13: #{tpu_custom_call.1} parent=11 // pred_check
          %p187 = pneg %p62
        $region14: #{tpu_custom_call.1} parent=11 // pred_check_branch
          %189 = sbr.rel (%p187) target = $region16
        $region15: #{tpu_custom_call.1} parent=11 // pred_region
          _
        $region16: #{tpu_custom_call.1} parent=11 // pred_fallthru
          _
        // Predicated region
        $region17: #{tpu_custom_call.1} parent=11 // pred_check
          %p190 = pneg %p83
        $region18: #{tpu_custom_call.1} parent=11 // pred_check_branch
          %192 = sbr.rel (%p190) target = $region20
        $region19: #{tpu_custom_call.1} parent=11 // pred_region
          _
        $region20: #{tpu_custom_call.1} parent=11 // pred_fallthru
          _
        // Predicated region
        $region21: #{tpu_custom_call.1} parent=11 // pred_check
          %p193 = pneg %p104
        $region22: #{tpu_custom_call.1} parent=11 // pred_check_branch
          %195 = sbr.rel (%p193) target = $region24
        $region23: #{tpu_custom_call.1} parent=11 // pred_region
          _
        $region24: #{tpu_custom_call.1} parent=11 // pred_fallthru
          _
        // Predicated region
        $region25: #{tpu_custom_call.1} parent=11 // pred_check
          %p196 = pneg %p125
        $region26: #{tpu_custom_call.1} parent=11 // pred_check_branch
          %198 = sbr.rel (%p196) target = $region28
        $region27: #{tpu_custom_call.1} parent=11 // pred_region
          _
        $region28: #{tpu_custom_call.1} parent=11 // pred_fallthru
          _
        // Predicated region
        $region29: #{tpu_custom_call.1} parent=11 // pred_check
          %p199 = pneg %p146
        $region30: #{tpu_custom_call.1} parent=11 // pred_check_branch
          %201 = sbr.rel (%p199) target = $region32
        $region31: #{tpu_custom_call.1} parent=11 // pred_region
          _
        $region32: #{tpu_custom_call.1} parent=11 // pred_fallthru
          _
      $region12: #{tpu_custom_call.1} parent=5 // pred_fallthru
        _
      %p202 = scmp.lt.s32.totalorder %s15, 2
      // Predicated region
      $region33: #{tpu_custom_call.1} parent=5 // pred_check
        %p203 = pneg %p202
      $region34: #{tpu_custom_call.1} parent=5 // pred_check_branch
        %205 = sbr.rel (%p203) target = $region36
      $region35: #{tpu_custom_call.1} parent=5 // pred_region
        // Predicated region
        $region37: #{tpu_custom_call.1} parent=35 // pred_check
          %p206 = pneg %p35
        $region38: #{tpu_custom_call.1} parent=35 // pred_check_branch
          %208 = sbr.rel (%p206) target = $region40
        $region39: #{tpu_custom_call.1} parent=35 // pred_region
          %p209 = scmp.lt.s32.totalorder %s15, 1
          %s210 = scalar_select %p209, %s15, 1
          %s211 = smul.addr %s210, 4
          %s212 = scalar_lea.vmem %s0, %s211
        $region40: #{tpu_custom_call.1} parent=35 // pred_fallthru
          _
      $region36: #{tpu_custom_call.1} parent=5 // pred_fallthru
        _
      %p213 = scmp.le.s32.totalorder 1, %s15
      %p214 = scmp.lt.s32.totalorder %s15, 3
      %p215 = pnand %p213, %p214
      %p216 = pneg %p215
      // Predicated region
      $region41: #{tpu_custom_call.1} parent=5 // pred_check
        _
      $region42: #{tpu_custom_call.1} parent=5 // pred_check_branch
        %218 = sbr.rel (%p215) target = $region44
      $region43: #{tpu_custom_call.1} parent=5 // pred_region
        %s219 = ssub.s32 %s15, 1
        %p220 = scmp.lt.s32.totalorder %s20, 1
        %s221 = scalar_select %p220, %s20, 1
        %s222 = smul.addr %s221, 4
        %s223 = scalar_lea.vmem %s0, %s222
        %p224 = pneg %p41
        %p225 = pneg %p38
        %p226 = pneg %p62
        %p227 = pneg %p59
        %p228 = pneg %p83
        %p229 = pneg %p80
        %p230 = pneg %p104
        %p231 = pneg %p101
        %p232 = pneg %p125
        %p233 = pneg %p122
        %p234 = pneg %p146
        %p235 = pneg %p143
        %p236 = pneg %p172
        %p237 = pneg %p169
        %s238 = sand.u32 %s159, 1
        %s239 = scalar_lea.sflag [#allocation3], %s238
        %s240 = sand.u32 %s159, 1
        %s241 = scalar_lea.vmem [#allocation2], %s240
        %p242 = scmp.lt.s32.totalorder %s20, 1
        %s243 = scalar_select %p242, %s20, 1
        %s244 = smul.addr %s243, 4
        %s245 = scalar_lea.vmem %s0, %s244
        %v246 = vld [vmem:[%s1] sm:$0xff]
        %v247 = vld [vmem:[%s1 + $0x8] sm:$0xff]
        %v248 = vld [vmem:[%s1 + $0x10] sm:$0xff]
        %v249 = vld [vmem:[%s1 + $0x18] sm:$0xff]
        %v250 = vld [vmem:[%s245] sm:$0x7]
        %vm251 = vcmask 23552
        %v253 = vsel %vm251, %v246, 0
        %v256 = vsel %vm251, %v247, 0
        %v259 = vsel %vm251, %v248, 0
        %v262 = vsel %vm251, %v249, 0
        %vm264 = vcmask 1042432
        %v266 = vsel %vm264, %v250, 0
        %268 = vmatprep.subr.mxu0 0.0
        %269 = vmatpush1.msra.mxu0 %v266
        %270 = vmatprep.subr.mxu0 0.0
        %271 = vmatpush1.msra.mxu0 0.0
        %272 = vmatprep.subr.mxu0 0.0
        %273 = vmatpush1.msra.mxu0 0.0
        %274 = vmatprep.subr.mxu0 0.0
        %275 = vmatpush1.msra.mxu0 0.0
        %276 = vmatprep.subr.mxu0 0.0
        %277 = vmatpush1.msra.mxu0 0.0
        %278 = vmatprep.subr.mxu0 0.0
        %279 = vmatpush1.msra.mxu0 0.0
        %280 = vmatprep.subr.mxu0 0.0
        %281 = vmatpush1.msra.mxu0 0.0
        %282 = vmatprep.subr.mxu0 0.0
        %283 = vmatpush1.msra.mxu0 0.0
        %284 = vmatprep.subr.mxu0 0.0
        %285 = vmatpush1.msra.mxu0 0.0
        %286 = vmatprep.subr.mxu0 0.0
        %287 = vmatpush1.msra.mxu0 0.0
        %288 = vmatprep.subr.mxu0 0.0
        %289 = vmatpush1.msra.mxu0 0.0
        %290 = vmatprep.subr.mxu0 0.0
        %291 = vmatpush1.msra.mxu0 0.0
        %292 = vmatprep.subr.mxu0 0.0
        %293 = vmatpush1.msra.mxu0 0.0
        %294 = vmatprep.subr.mxu0 0.0
        %295 = vmatpush1.msra.mxu0 0.0
        %296 = vmatprep.subr.mxu0 0.0
        %297 = vmatpush1.msra.mxu0 0.0
        %298 = vmatprep.subr.mxu0 0.0
        %299 = vmatpush1.msra.mxu0 0.0
        %300 = vmatprep.subr.mxu0 0.0
        %301 = vmatpush1.msra.mxu0 0.0
        %302 = vmatprep.subr.mxu0 0.0
        %303 = vmatpush1.msra.mxu0 0.0
        %304 = vmatprep.subr.mxu0 0.0
        %305 = vmatpush1.msra.mxu0 0.0
        %306 = vmatprep.subr.mxu0 0.0
        %307 = vmatpush1.msra.mxu0 0.0
        %308 = vmatprep.subr.mxu0 0.0
        %309 = vmatpush1.msra.mxu0 0.0
        %310 = vmatprep.subr.mxu0 0.0
        %311 = vmatpush1.msra.mxu0 0.0
        %312 = vmatprep.subr.mxu0 0.0
        %313 = vmatpush1.msra.mxu0 0.0
        %314 = vmatprep.subr.mxu0 0.0
        %315 = vmatpush1.msra.mxu0 0.0
        %316 = vmatprep.subr.mxu0 0.0
        %317 = vmatpush1.msra.mxu0 0.0
        %318 = vmatprep.subr.mxu0 0.0
        %319 = vmatpush1.msra.mxu0 0.0
        %320 = vmatprep.subr.mxu0 0.0
        %321 = vmatpush1.msra.mxu0 0.0
        %322 = vmatprep.subr.mxu0 0.0
        %323 = vmatpush1.msra.mxu0 0.0
        %324 = vmatprep.subr.mxu0 0.0
        %325 = vmatpush1.msra.mxu0 0.0
        %326 = vmatprep.subr.mxu0 0.0
        %327 = vmatpush1.msra.mxu0 0.0
        %328 = vmatprep.subr.mxu0 0.0
        %329 = vmatpush1.msra.mxu0 0.0
        %330 = vmatprep.subr.mxu0 0.0
        %331 = vmatpush1.msra.mxu0 0.0
        %332 = vmatprep.mubr.f32.mxu0 0.0
        %333 = vmatmul.mubr.f32.gmra.mrb[0].mxu0 %v253
        %v334 = vpop.f32.mrb[0].mxu0
        %v335 = vadd.f32 0.0, %v334
        %v336 = vpop.f32.mrb[0].mxu0
        %337 = vmatprep.mubr.f32.mxu0 0.0
        %338 = vmatmul.mubr.f32.gmra.mrb[0].mxu0 %v256
        %v339 = vpop.f32.mrb[0].mxu0
        %v340 = vadd.f32 0.0, %v339
        %v341 = vpop.f32.mrb[0].mxu0
        %342 = vmatprep.mubr.f32.mxu0 0.0
        %343 = vmatmul.mubr.f32.gmra.mrb[0].mxu0 %v259
        %v344 = vpop.f32.mrb[0].mxu0
        %v345 = vadd.f32 0.0, %v344
        %v346 = vpop.f32.mrb[0].mxu0
        %347 = vmatprep.mubr.f32.mxu0 0.0
        %348 = vmatmul.mubr.f32.gmra.mrb[0].mxu0 %v262
        %v349 = vpop.f32.mrb[0].mxu0
        %v350 = vadd.f32 0.0, %v349
        %v351 = vpop.f32.mrb[0].mxu0
        %352 = vdwg.mxu0
        %v353 = vtanh.pop %v335
        %v354 = vtanh.pop %v340
        %v355 = vtanh.pop %v345
        %v356 = vtanh.pop %v350
        %v357 = vmul.f32 %v353, %v353
        %v358 = vmul.f32 %v354, %v354
        %v359 = vmul.f32 %v355, %v355
        %v360 = vmul.f32 %v356, %v356
        %v361 = vld [vmem:[%s2] sm:$0x7]
        %v362 = vld [vmem:[%s3] sm:$0x7]
        %364 = vset.pattern.permute.xlu0 0
        %365 = vperm.xlu0 %364, %v362
        %v366 = vpop.permute.xlu0 %365
        %vm368 = vcmask 261120
        %v370 = vsel %vm368, %v361, 0
        %372 = vmatprep.subr.mxu0 0.0
        %373 = vmatpush1.msra.mxu0 %v353
        %374 = vmatprep.subr.mxu0 0.0
        %375 = vmatpush1.msra.mxu0 %v354
        %376 = vmatprep.subr.mxu0 0.0
        %377 = vmatpush1.msra.mxu0 %v355
        %378 = vmatprep.subr.mxu0 0.0
        %379 = vmatpush1.msra.mxu0 %v356
        %380 = vmatprep.subr.mxu0 0.0
        %381 = vmatpush1.msra.mxu0 0.0
        %382 = vmatprep.subr.mxu0 0.0
        %383 = vmatpush1.msra.mxu0 0.0
        %384 = vmatprep.subr.mxu0 0.0
        %385 = vmatpush1.msra.mxu0 0.0
        %386 = vmatprep.subr.mxu0 0.0
        %387 = vmatpush1.msra.mxu0 0.0
        %388 = vmatprep.subr.mxu0 0.0
        %389 = vmatpush1.msra.mxu0 0.0
        %390 = vmatprep.subr.mxu0 0.0
        %391 = vmatpush1.msra.mxu0 0.0
        %392 = vmatprep.subr.mxu0 0.0
        %393 = vmatpush1.msra.mxu0 0.0
        %394 = vmatprep.subr.mxu0 0.0
        %395 = vmatpush1.msra.mxu0 0.0
        %396 = vmatprep.subr.mxu0 0.0
        %397 = vmatpush1.msra.mxu0 0.0
        %398 = vmatprep.subr.mxu0 0.0
        %399 = vmatpush1.msra.mxu0 0.0
        %400 = vmatprep.subr.mxu0 0.0
        %401 = vmatpush1.msra.mxu0 0.0
        %402 = vmatprep.subr.mxu0 0.0
        %403 = vmatpush1.msra.mxu0 0.0
        %404 = vmatprep.subr.mxu0 0.0
        %405 = vmatpush1.msra.mxu0 0.0
        %406 = vmatprep.subr.mxu0 0.0
        %407 = vmatpush1.msra.mxu0 0.0
        %408 = vmatprep.subr.mxu0 0.0
        %409 = vmatpush1.msra.mxu0 0.0
        %410 = vmatprep.subr.mxu0 0.0
        %411 = vmatpush1.msra.mxu0 0.0
        %412 = vmatprep.subr.mxu0 0.0
        %413 = vmatpush1.msra.mxu0 0.0
        %414 = vmatprep.subr.mxu0 0.0
        %415 = vmatpush1.msra.mxu0 0.0
        %416 = vmatprep.subr.mxu0 0.0
        %417 = vmatpush1.msra.mxu0 0.0
        %418 = vmatprep.subr.mxu0 0.0
        %419 = vmatpush1.msra.mxu0 0.0
        %420 = vmatprep.subr.mxu0 0.0
        %421 = vmatpush1.msra.mxu0 0.0
        %422 = vmatprep.subr.mxu0 0.0
        %423 = vmatpush1.msra.mxu0 0.0
        %424 = vmatprep.subr.mxu0 0.0
        %425 = vmatpush1.msra.mxu0 0.0
        %426 = vmatprep.subr.mxu0 0.0
        %427 = vmatpush1.msra.mxu0 0.0
        %428 = vmatprep.subr.mxu0 0.0
        %429 = vmatpush1.msra.mxu0 0.0
        %430 = vmatprep.subr.mxu0 0.0
        %431 = vmatpush1.msra.mxu0 0.0
        %432 = vmatprep.subr.mxu0 0.0
        %433 = vmatpush1.msra.mxu0 0.0
        %434 = vmatprep.subr.mxu0 0.0
        %435 = vmatpush1.msra.mxu0 0.0
        %436 = vmatprep.mubr.f32.mxu0 0.0
        %437 = vmatmul.mubr.f32.gmra.mrb[0].mxu0 %v370
        %v438 = vpop.f32.mrb[0].mxu0
        %v439 = vadd.f32 %v366, %v438
        %v440 = vpop.f32.mrb[0].mxu0
        %441 = vdwg.mxu0
        %v442 = vld [vmem:[%s5] sm:$0xf]
        %v443 = vld [vmem:[%s4] sm:$0xf]
        %v445 = vsel %vm368, %v443, 0
        %447 = vmatprep.subr.mxu0 0.0
        %448 = vmatpush1.msra.mxu0 %v357
        %449 = vmatprep.subr.mxu0 0.0
        %450 = vmatpush1.msra.mxu0 %v358
        %451 = vmatprep.subr.mxu0 0.0
        %452 = vmatpush1.msra.mxu0 %v359
        %453 = vmatprep.subr.mxu0 0.0
        %454 = vmatpush1.msra.mxu0 %v360
        %455 = vmatprep.subr.mxu0 0.0
        %456 = vmatpush1.msra.mxu0 0.0
        %457 = vmatprep.subr.mxu0 0.0
        %458 = vmatpush1.msra.mxu0 0.0
        %459 = vmatprep.subr.mxu0 0.0
        %460 = vmatpush1.msra.mxu0 0.0
        %461 = vmatprep.subr.mxu0 0.0
        %462 = vmatpush1.msra.mxu0 0.0
        %463 = vmatprep.subr.mxu0 0.0
        %464 = vmatpush1.msra.mxu0 0.0
        %465 = vmatprep.subr.mxu0 0.0
        %466 = vmatpush1.msra.mxu0 0.0
        %467 = vmatprep.subr.mxu0 0.0
        %468 = vmatpush1.msra.mxu0 0.0
        %469 = vmatprep.subr.mxu0 0.0
        %470 = vmatpush1.msra.mxu0 0.0
        %471 = vmatprep.subr.mxu0 0.0
        %472 = vmatpush1.msra.mxu0 0.0
        %473 = vmatprep.subr.mxu0 0.0
        %474 = vmatpush1.msra.mxu0 0.0
        %475 = vmatprep.subr.mxu0 0.0
        %476 = vmatpush1.msra.mxu0 0.0
        %477 = vmatprep.subr.mxu0 0.0
        %478 = vmatpush1.msra.mxu0 0.0
        %479 = vmatprep.subr.mxu0 0.0
        %480 = vmatpush1.msra.mxu0 0.0
        %481 = vmatprep.subr.mxu0 0.0
        %482 = vmatpush1.msra.mxu0 0.0
        %483 = vmatprep.subr.mxu0 0.0
        %484 = vmatpush1.msra.mxu0 0.0
        %485 = vmatprep.subr.mxu0 0.0
        %486 = vmatpush1.msra.mxu0 0.0
        %487 = vmatprep.subr.mxu0 0.0
        %488 = vmatpush1.msra.mxu0 0.0
        %489 = vmatprep.subr.mxu0 0.0
        %490 = vmatpush1.msra.mxu0 0.0
        %491 = vmatprep.subr.mxu0 0.0
        %492 = vmatpush1.msra.mxu0 0.0
        %493 = vmatprep.subr.mxu0 0.0
        %494 = vmatpush1.msra.mxu0 0.0
        %495 = vmatprep.subr.mxu0 0.0
        %496 = vmatpush1.msra.mxu0 0.0
        %497 = vmatprep.subr.mxu0 0.0
        %498 = vmatpush1.msra.mxu0 0.0
        %499 = vmatprep.subr.mxu0 0.0
        %500 = vmatpush1.msra.mxu0 0.0
        %501 = vmatprep.subr.mxu0 0.0
        %502 = vmatpush1.msra.mxu0 0.0
        %503 = vmatprep.subr.mxu0 0.0
        %504 = vmatpush1.msra.mxu0 0.0
        %505 = vmatprep.subr.mxu0 0.0
        %506 = vmatpush1.msra.mxu0 0.0
        %507 = vmatprep.subr.mxu0 0.0
        %508 = vmatpush1.msra.mxu0 0.0
        %509 = vmatprep.subr.mxu0 0.0
        %510 = vmatpush1.msra.mxu0 0.0
        %511 = vmatprep.mubr.f32.mxu0 0.0
        %512 = vmatmul.mubr.f32.gmra.mrb[0].mxu0 %v445
        %v513 = vpop.f32.mrb[0].mxu0
        %v514 = vadd.f32 0.0, %v513
        %v515 = vpop.f32.mrb[0].mxu0
        %516 = vdwg.mxu0
        %518 = vset.pattern.permute.xlu0 0
        %519 = vperm.xlu0 %518, %v442
        %v520 = vpop.permute.xlu0 %519
        %v522 = vsub.f32 %v520, %v514
        %v523 = vsub.f32 %v439, 0.5
        %v524 = vmul.f32 %v439, %v522
        %v526 = vrot.slane %v522, 1
        %v528 = vmul.f32 %v439, %v526
        %v530 = vrot.slane %v528, 1
        %v532 = vadd.f32 %v524, %v530
        %v533 = vmul.f32 %v523, %v532
        %v534 = vrot.slane %v522, 2
        %v536 = vmul.f32 %v439, %v534
        %v538 = vrot.slane %v536, 1
        %v540 = vadd.f32 %v528, %v538
        %v542 = vrot.slane %v540, 7
        %v544 = vmul.f32 %v523, %v542
        %v546 = vrot.slane %v544, 1
        %v548 = vadd.f32 %v533, %v546
        %v549 = vmul.f32 %v439, 0.03
        %v551 = vrot.slane %v549, 2
        %v553 = vsub.f32 %v548, %v551
        %554 = vst [vmem:[%s241] sm:$0x1] %v553
        %s555 = sand.u32 %s159, 1
        %s556 = scalar_lea.sflag [#allocation3], %s555
        %s557 = sand.u32 %s159, 1
        %s558 = scalar_lea.vmem [#allocation2], %s557
        // Predicated region
        $region45: #{tpu_custom_call.1} parent=43 // pred_check
          %p559 = pneg %p169
        $region46: #{tpu_custom_call.1} parent=43 // pred_check_branch
          %561 = sbr.rel (%p559) target = $region48
        $region47: #{tpu_custom_call.1} parent=43 // pred_region
          %s563 = ssub.s32 16, 16
          %564 = vsyncadd %s556, %s563
          %s565 = smul.addr %s20, 16
          %s566 = scalar_lea.hbm %s6, %s565
          %s568 = sshll.u32 %s558, 4
          %s569 = int_to_ptr.vmem [resolvable:$true] %s568
          %571 = dma.vmem_to_hbm [thread:$0]  %s569, 16, %s566, %s556
        $region48: #{tpu_custom_call.1} parent=43 // pred_fallthru
          _
      $region44: #{tpu_custom_call.1} parent=5 // pred_fallthru
        _
      %p572 = scmp.le.s32.totalorder 2, %s15
      // Predicated region
      $region49: #{tpu_custom_call.1} parent=5 // pred_check
        %p573 = pneg %p572
      $region50: #{tpu_custom_call.1} parent=5 // pred_check_branch
        %575 = sbr.rel (%p573) target = $region52
      $region51: #{tpu_custom_call.1} parent=5 // pred_region
        %s576 = ssub.s32 %s15, 2
        // Predicated region
        $region53: #{tpu_custom_call.1} parent=51 // pred_check
          %p577 = pneg %p175
        $region54: #{tpu_custom_call.1} parent=51 // pred_check_branch
          %579 = sbr.rel (%p577) target = $region56
        $region55: #{tpu_custom_call.1} parent=51 // pred_region
          %s580 = sand.u32 %s160, 1
          %s581 = scalar_lea.sflag [#allocation3], %s580
          %s582 = sand.u32 %s160, 1
          %s583 = scalar_lea.vmem [#allocation2], %s582
          %584 = dma.done %s581, 16
        $region56: #{tpu_custom_call.1} parent=51 // pred_fallthru
          _
      $region52: #{tpu_custom_call.1} parent=5 // pred_fallthru
        _
    $region6: #{tpu_custom_call.1} parent=1 // loop_footer
      %s19 = sadd.s32 1, %s15
    $region7: #{tpu_custom_call.1} parent=1 // loop_footer_branch
      %14 = sbr.rel target = $region3
    $region8: #{tpu_custom_call.1} parent=1 // loop_exit
      _
    %585 = vsyncpa [#allocation3], 1
    %s586 = scalar_lea.sflag [#allocation3], 1
    %587 = vsyncpa %s586, 1

</llo_original>
